<compile_context>
chip_gen: v7x
topology: tpu7x:2x2x1
jax: 0.10.0
libtpu: 0.0.40
codegen_flags: <defaults>
</compile_context>

<pallas_src>
import jax
import jax.numpy as jnp
from jax.experimental import pallas as pl
from jax.experimental.pallas import tpu as pltpu


def _round_up(x: int, m: int) -> int:
    return (x + m - 1) // m * m


def _projection_kernel(x_ref, w_ref, b_ref, o_ref, logits_ref, m_ref, l_ref):
    """Grid = (token_tiles, 2 * vocab_tiles); see header for the 2-sweep scheme."""
    jj = pl.program_id(1)
    nj = pl.num_programs(1) // 2

    @pl.when(jj == 0)
    def _init():
        m_ref[...] = jnp.full(m_ref.shape, -jnp.inf, dtype=m_ref.dtype)
        l_ref[...] = jnp.zeros(l_ref.shape, dtype=l_ref.dtype)

    @pl.when(jj < nj)
    def _sweep_a():
        # (tm, d_model) @ (d_model, tn) on the MXU, f32 accumulate.
        logits = jnp.dot(x_ref[...], w_ref[...],
                         preferred_element_type=jnp.float32)
        logits = logits + b_ref[...]            # bias already f32, (1, tn)
        logits_ref[jj] = logits                 # stash tile for sweep B
        # Online running max / sum-exp (all f32; exp on the EUP).
        m_prev = m_ref[...]
        m_new = jnp.maximum(m_prev, jnp.max(logits, axis=-1, keepdims=True))
        l_ref[...] = (l_ref[...] * jnp.exp(m_prev - m_new)
                      + jnp.sum(jnp.exp(logits - m_new), axis=-1, keepdims=True))
        m_ref[...] = m_new

    @pl.when(jj >= nj)
    def _sweep_b():
        j = jj - nj
        lse = m_ref[...] + jnp.log(l_ref[...])
        o_ref[...] = (logits_ref[j] - lse).astype(o_ref.dtype)


def projection_layer(x, w_t, b, *, tm=256, tn=512,
                     compute_dtype=jnp.bfloat16, out_dtype=None):
    """log_softmax(x @ w_t + b, axis=-1).

    x:   (batch, seq, d_model)
    w_t: (d_model, vocab)    (transposed nn.Linear weight)
    b:   (vocab,)
    """
    batch, seq, d_model = x.shape
    vocab = w_t.shape[1]
    if out_dtype is None:
        out_dtype = x.dtype
    tokens = batch * seq

    # Effective tile sizes: clamp for small problems, align to (16, 128) so
    # blocks are legal for both f32 and packed bf16 layouts and output stores
    # are lane-dense (unmasked vst).
    tm_eff = _round_up(min(tm, _round_up(tokens, 16)), 16)
    tn_eff = _round_up(min(tn, _round_up(vocab, 128)), 128)

    tokens_p = _round_up(tokens, tm_eff)
    vocab_p = _round_up(vocab, tn_eff)
    d_model_p = _round_up(d_model, 128)
    ni = tokens_p // tm_eff
    nj = vocab_p // tn_eff

    x2 = x.reshape(tokens, d_model).astype(compute_dtype)
    w2 = w_t.astype(compute_dtype)
    b2 = b.astype(jnp.float32).reshape(1, vocab)

    if tokens_p != tokens or d_model_p != d_model:
        x2 = jnp.pad(x2, ((0, tokens_p - tokens), (0, d_model_p - d_model)))
    if d_model_p != d_model or vocab_p != vocab:
        w2 = jnp.pad(w2, ((0, d_model_p - d_model), (0, vocab_p - vocab)))
    if vocab_p != vocab:
        # Padded vocab columns get a huge negative bias so they contribute
        # ~0 to the softmax normalizer; they are sliced off at the end.
        b2 = jnp.pad(b2, ((0, 0), (0, vocab_p - vocab)), constant_values=-1e30)

    # Working-set based VMEM limit (tiles are double-buffered by the pipeline).
    cb = jnp.dtype(compute_dtype).itemsize
    ob = jnp.dtype(out_dtype).itemsize
    working_set = (
        2 * tm_eff * d_model_p * cb        # x tile
        + 2 * d_model_p * tn_eff * cb      # weight tile
        + 2 * tn_eff * 4                   # bias tile
        + 2 * tm_eff * tn_eff * ob         # output tile
        + nj * tm_eff * tn_eff * 4         # f32 logits scratch
        + 2 * tm_eff * 128 * 4             # m / l scratch (lane-padded)
    )
    vmem_limit = min(max(int(working_set * 1.5), 32 << 20), 100 << 20)
    # TODO(synk): for very large (tm * vocab) the logits scratch dominates; on
    # v7x (64 MiB VMEM) choose tm=128 / smaller tn at the call site.

    out = pl.pallas_call(
        _projection_kernel,
        out_shape=jax.ShapeDtypeStruct((tokens_p, vocab_p), out_dtype),
        grid_spec=pltpu.PrefetchScalarGridSpec(
            num_scalar_prefetch=0,
            grid=(ni, 2 * nj),
            in_specs=[
                # x tile stays resident across the whole vocab loop.
                pl.BlockSpec((tm_eff, d_model_p), lambda i, jj: (i, 0)),
                # Weight / bias tiles stream during sweep A, stay parked
                # (no re-fetch) during sweep B.
                pl.BlockSpec((d_model_p, tn_eff),
                             lambda i, jj: (0, jnp.minimum(jj, nj - 1))),
                pl.BlockSpec((1, tn_eff),
                             lambda i, jj: (0, jnp.minimum(jj, nj - 1))),
            ],
            # Output block pinned to (i, 0) during sweep A (never flushed),
            # then advances one lane-dense (tm, tn) tile per sweep-B step.
            out_specs=pl.BlockSpec((tm_eff, tn_eff),
                                   lambda i, jj: (i, jnp.maximum(jj - nj, 0))),
            scratch_shapes=[
                pltpu.VMEM((nj, tm_eff, tn_eff), jnp.float32),  # logits stash
                pltpu.VMEM((tm_eff, 1), jnp.float32),           # running max
                pltpu.VMEM((tm_eff, 1), jnp.float32),           # running sumexp
            ],
        ),
        compiler_params=pltpu.CompilerParams(
            dimension_semantics=("parallel", "arbitrary"),
            vmem_limit_bytes=vmem_limit,
        ),
    )(x2, w2, b2)

    return out[:tokens, :vocab].reshape(batch, seq, vocab)


if __name__ == "__main__":
    # Small, deliberately unaligned shapes to exercise padding + vocab tiling.
    batch, seq, d_model, vocab = 2, 8, 96, 300

    key = jax.random.PRNGKey(0)
    kx, kw, kb = jax.random.split(key, 3)
    x = jax.random.normal(kx, (batch, seq, d_model), dtype=jnp.float32)
    # nn.Linear(d_model, vocab): weight (vocab, d_model), bias (vocab,).
    w = jax.random.normal(kw, (vocab, d_model), dtype=jnp.float32) * (d_model ** -0.5)
    b = jax.random.normal(kb, (vocab,), dtype=jnp.float32) * 0.01
    w_t = w.T  # (d_model, vocab)

    ref = jax.nn.log_softmax(
        jnp.einsum("bsd,dv->bsv", x, w_t,
                   precision=jax.lax.Precision.HIGHEST) + b, axis=-1)

    # 1) Production config: bf16 matmul inputs, f32 accumulate + softmax.
    out_bf16 = projection_layer(x, w_t, b, tm=256, tn=128,
                                compute_dtype=jnp.bfloat16)
    jax.block_until_ready(out_bf16)
    assert out_bf16.shape == (batch, seq, vocab)
    assert bool(jnp.all(jnp.isfinite(out_bf16)))
    assert jnp.allclose(out_bf16, ref, atol=8e-2), "bf16 path mismatch"
    row_sums = jnp.sum(jnp.exp(out_bf16), axis=-1)
    assert jnp.allclose(row_sums, 1.0, atol=3e-2), "log_softmax rows must sum to 1"

    # 2) f32 compute path for a tighter numerical check.
    out_f32 = projection_layer(x, w_t, b, tm=256, tn=128,
                               compute_dtype=jnp.float32)
    jax.block_until_ready(out_f32)
    assert jnp.allclose(out_f32, ref, atol=2e-3), "f32 path mismatch"

    print("KERNEL_OK")
</pallas_src>

<mosaic_0001>
module attributes {stable_mosaic.version = 11 : i64} {
  func.func @_projection_kernel(%arg0: i32, %arg1: i32, %arg2: memref<16x128xbf16, #tpu.memory_space<vmem>>, %arg3: memref<128x128xbf16, #tpu.memory_space<vmem>>, %arg4: memref<1x128xf32, #tpu.memory_space<vmem>>, %arg5: memref<16x128xf32, #tpu.memory_space<vmem>>, %arg6: memref<3x16x128xf32, #tpu.memory_space<vmem>>, %arg7: memref<16x1xf32, #tpu.memory_space<vmem>>, %arg8: memref<16x1xf32, #tpu.memory_space<vmem>>) attributes {dimension_semantics = [#tpu.dimension_semantics<parallel>, #tpu.dimension_semantics<arbitrary>], iteration_bounds = array<i64: 1, 6>, scalar_prefetch = 0 : i64, scratch_operands = 3 : i64, tpu.core_type = #tpu.core_type<tc>, window_params = [{transform_indices = @transform_0, window_bounds = array<i64: 16, 128>}, {transform_indices = @transform_1, window_bounds = array<i64: 128, 128>}, {transform_indices = @transform_2, window_bounds = array<i64: 1, 128>}, {transform_indices = @transform_3, window_bounds = array<i64: 16, 128>}]} {
    %c0_i32 = arith.constant 0 : i32
    %0 = arith.cmpi eq, %arg1, %c0_i32 : i32
    %1 = arith.extui %0 : i1 to i32
    %c0_i32_0 = arith.constant 0 : i32
    %2 = arith.cmpi ne, %1, %c0_i32_0 : i32
    scf.if %2 {
      %cst = arith.constant 0xFF800000 : f32
      %9 = vector.broadcast %cst : f32 to vector<16x1xf32>
      %c0 = arith.constant 0 : index
      %c0_4 = arith.constant 0 : index
      %10 = vector.load %arg7[%c0, %c0_4] : memref<16x1xf32, #tpu.memory_space<vmem>>, vector<16x1xf32>
      tpu.vector_store %arg7[%c0, %c0_4], %9 {strides = array<i32>} : memref<16x1xf32, #tpu.memory_space<vmem>>, vector<16x1xf32>,
      %cst_5 = arith.constant 0.000000e+00 : f32
      %11 = vector.broadcast %cst_5 : f32 to vector<16x1xf32>
      %c0_6 = arith.constant 0 : index
      %c0_7 = arith.constant 0 : index
      %12 = vector.load %arg8[%c0_6, %c0_7] : memref<16x1xf32, #tpu.memory_space<vmem>>, vector<16x1xf32>
      tpu.vector_store %arg8[%c0_6, %c0_7], %11 {strides = array<i32>} : memref<16x1xf32, #tpu.memory_space<vmem>>, vector<16x1xf32>,
    } else {
    }
    %c3_i32 = arith.constant 3 : i32
    %3 = arith.cmpi slt, %arg1, %c3_i32 : i32
    %4 = arith.extui %3 : i1 to i32
    %c0_i32_1 = arith.constant 0 : i32
    %5 = arith.cmpi ne, %4, %c0_i32_1 : i32
    scf.if %5 {
      %c0 = arith.constant 0 : index
      %c0_4 = arith.constant 0 : index
      %9 = vector.load %arg2[%c0, %c0_4] : memref<16x128xbf16, #tpu.memory_space<vmem>>, vector<16x128xbf16>
      %c0_5 = arith.constant 0 : index
      %c0_6 = arith.constant 0 : index
      %10 = vector.load %arg3[%c0_5, %c0_6] : memref<128x128xbf16, #tpu.memory_space<vmem>>, vector<128x128xbf16>
      %cst = arith.constant dense<0.000000e+00> : vector<16x128xf32>
      %11 = tpu.matmul %9, %10, %cst {dimension_numbers = #tpu.dot_dimension_numbers<[1], [0], [0], [1], [0, 0, 1, 1], [], []>} : vector<16x128xbf16>, vector<128x128xbf16>, vector<16x128xf32> -> vector<16x128xf32>
      %c0_7 = arith.constant 0 : index
      %c0_8 = arith.constant 0 : index
      %12 = vector.load %arg4[%c0_7, %c0_8] : memref<1x128xf32, #tpu.memory_space<vmem>>, vector<1x128xf32>
      %13 = vector.broadcast %12 : vector<1x128xf32> to vector<16x128xf32>
      %14 = arith.addf %11, %13 : vector<16x128xf32>
      %15 = arith.index_cast %arg1 : i32 to index
      %c0_9 = arith.constant 0 : index
      %c0_10 = arith.constant 0 : index
      %16 = vector.load %arg6[%15, %c0_9, %c0_10] : memref<3x16x128xf32, #tpu.memory_space<vmem>>, vector<1x16x128xf32>
      %17 = vector.shape_cast %16 : vector<1x16x128xf32> to vector<16x128xf32>
      %18 = vector.shape_cast %14 : vector<16x128xf32> to vector<1x16x128xf32>
      tpu.vector_store %arg6[%15, %c0_9, %c0_10], %18 {strides = array<i32>} : memref<3x16x128xf32, #tpu.memory_space<vmem>>, vector<1x16x128xf32>,
      %c0_11 = arith.constant 0 : index
      %c0_12 = arith.constant 0 : index
      %19 = vector.load %arg7[%c0_11, %c0_12] : memref<16x1xf32, #tpu.memory_space<vmem>>, vector<16x1xf32>
      %cst_13 = arith.constant dense<0xFF800000> : vector<16xf32>
      %20 = vector.multi_reduction <maximumf>, %14, %cst_13 [1] : vector<16x128xf32> to vector<16xf32>
      %21 = vector.shape_cast %20 : vector<16xf32> to vector<16x1xf32>
      %22 = arith.maximumf %19, %21 : vector<16x1xf32>
      %c0_14 = arith.constant 0 : index
      %c0_15 = arith.constant 0 : index
      %23 = vector.load %arg8[%c0_14, %c0_15] : memref<16x1xf32, #tpu.memory_space<vmem>>, vector<16x1xf32>
      %24 = arith.subf %19, %22 : vector<16x1xf32>
      %25 = math.exp %24 : vector<16x1xf32>
      %26 = arith.mulf %23, %25 : vector<16x1xf32>
      %27 = vector.broadcast %22 : vector<16x1xf32> to vector<16x128xf32>
      %28 = arith.subf %14, %27 : vector<16x128xf32>
      %29 = math.exp %28 : vector<16x128xf32>
      %cst_16 = arith.constant dense<0.000000e+00> : vector<16xf32>
      %30 = vector.multi_reduction <add>, %29, %cst_16 [1] : vector<16x128xf32> to vector<16xf32>
      %31 = vector.shape_cast %30 : vector<16xf32> to vector<16x1xf32>
      %32 = arith.addf %26, %31 : vector<16x1xf32>
      %c0_17 = arith.constant 0 : index
      %c0_18 = arith.constant 0 : index
      %33 = vector.load %arg8[%c0_17, %c0_18] : memref<16x1xf32, #tpu.memory_space<vmem>>, vector<16x1xf32>
      tpu.vector_store %arg8[%c0_17, %c0_18], %32 {strides = array<i32>} : memref<16x1xf32, #tpu.memory_space<vmem>>, vector<16x1xf32>,
      %c0_19 = arith.constant 0 : index
      %c0_20 = arith.constant 0 : index
      %34 = vector.load %arg7[%c0_19, %c0_20] : memref<16x1xf32, #tpu.memory_space<vmem>>, vector<16x1xf32>
      tpu.vector_store %arg7[%c0_19, %c0_20], %22 {strides = array<i32>} : memref<16x1xf32, #tpu.memory_space<vmem>>, vector<16x1xf32>,
    } else {
    }
    %c3_i32_2 = arith.constant 3 : i32
    %6 = arith.cmpi sge, %arg1, %c3_i32_2 : i32
    %7 = arith.extui %6 : i1 to i32
    %c0_i32_3 = arith.constant 0 : i32
    %8 = arith.cmpi ne, %7, %c0_i32_3 : i32
    scf.if %8 {
      %c3_i32_4 = arith.constant 3 : i32
      %9 = arith.subi %arg1, %c3_i32_4 : i32
      %c0 = arith.constant 0 : index
      %c0_5 = arith.constant 0 : index
      %10 = vector.load %arg7[%c0, %c0_5] : memref<16x1xf32, #tpu.memory_space<vmem>>, vector<16x1xf32>
      %c0_6 = arith.constant 0 : index
      %c0_7 = arith.constant 0 : index
      %11 = vector.load %arg8[%c0_6, %c0_7] : memref<16x1xf32, #tpu.memory_space<vmem>>, vector<16x1xf32>
      %12 = math.log %11 : vector<16x1xf32>
      %13 = arith.addf %10, %12 : vector<16x1xf32>
      %14 = arith.index_cast %9 : i32 to index
      %c0_8 = arith.constant 0 : index
      %c0_9 = arith.constant 0 : index
      %15 = vector.load %arg6[%14, %c0_8, %c0_9] : memref<3x16x128xf32, #tpu.memory_space<vmem>>, vector<1x16x128xf32>
      %16 = vector.shape_cast %15 : vector<1x16x128xf32> to vector<16x128xf32>
      %17 = vector.broadcast %13 : vector<16x1xf32> to vector<16x128xf32>
      %18 = arith.subf %16, %17 : vector<16x128xf32>
      %c0_10 = arith.constant 0 : index
      %c0_11 = arith.constant 0 : index
      %19 = vector.load %arg5[%c0_10, %c0_11] : memref<16x128xf32, #tpu.memory_space<vmem>>, vector<16x128xf32>
      tpu.vector_store %arg5[%c0_10, %c0_11], %18 {strides = array<i32>} : memref<16x128xf32, #tpu.memory_space<vmem>>, vector<16x128xf32>,
    } else {
    }
    return
  }
  func.func @transform_0(%arg0: i32, %arg1: i32) -> (i32, i32) {
    %c0_i32 = arith.constant 0 : i32
    %c0_i32_0 = arith.constant 0 : i32
    return %arg0, %c0_i32 : i32, i32
  }
  func.func @transform_1(%arg0: i32, %arg1: i32) -> (i32, i32) {
    %c2_i32 = arith.constant 2 : i32
    %0 = arith.minsi %arg1, %c2_i32 : i32
    %c0_i32 = arith.constant 0 : i32
    %c0_i32_0 = arith.constant 0 : i32
    return %c0_i32, %0 : i32, i32
  }
  func.func @transform_2(%arg0: i32, %arg1: i32) -> (i32, i32) {
    %c2_i32 = arith.constant 2 : i32
    %0 = arith.minsi %arg1, %c2_i32 : i32
    %c0_i32 = arith.constant 0 : i32
    %c0_i32_0 = arith.constant 0 : i32
    return %c0_i32, %0 : i32, i32
  }
  func.func @transform_3(%arg0: i32, %arg1: i32) -> (i32, i32) {
    %c3_i32 = arith.constant 3 : i32
    %0 = arith.subi %arg1, %c3_i32 : i32
    %c0_i32 = arith.constant 0 : i32
    %1 = arith.maxsi %0, %c0_i32 : i32
    %c0_i32_0 = arith.constant 0 : i32
    return %arg0, %1 : i32, i32
  }
}

</mosaic_0001>

<llo_original>
// kernel: tpu_custom_call.1
$region0: #{tpu_custom_call.1}
  #allocation0 [shape = 'u32[]', space=smem, size = 0x4, offset = 0x4, fixed_abs, tag = 'smem constant byte address 0x4 - core index']
  #allocation1 [shape = 'u32[144,128]{1,0:T(1,128)}', space=vmem, size = 0x12000, scoped, tag = 'internal scratch']
  #allocation2 [shape = 'f32[3,16,128]{2,1,0:T(8,128)}', space=vmem, size = 0x6000, scoped, tag = 'scratch operand']
  #allocation3 [shape = 'f32[16,1]{1,0:T(8,128)}', space=vmem, size = 0x2000, scoped, tag = 'scratch operand']
  #allocation4 [shape = 'f32[16,1]{1,0:T(8,128)}', space=vmem, size = 0x2000, scoped, tag = 'scratch operand']
  %s0 = inlined_call_operand.hbm [shape: bf16[16,128], index: 0, kind: input, shape index: {}]
  %s1 = inlined_call_operand.hbm [shape: bf16[128,384], index: 1, kind: input, shape index: {}]
  %s2 = inlined_call_operand.vmem [shape: f32[1,384], index: 2, kind: input, shape index: {}]
  %s3 = inlined_call_operand.hbm [shape: f32[16,384], index: 3, kind: output, shape index: {}]
  %s4 = sld [smem:[#allocation0]]
  $region65: #{tpu_custom_call.1} parent=0
    _
  %s6 = ssub.s32 1, %s4
  %s7 = scalar_select 0, %s6, %s4
  $region1: #{tpu_custom_call.1} parent=0
    #allocation5 [shape = 'u8[4096]{0}', space=vmem, size = 0x1000, scoped, tag = 'input window, operand 0, single buffered']
    #allocation6 [shape = 's32[2]{0}', space=sflag, size = 0x8, scoped, tag = 'scoped memory for tpu_custom_call.1']
    #allocation7 [shape = 's32[2]{0}', space=sflag, size = 0x8, scoped, tag = 'scoped memory for tpu_custom_call.1']
    #allocation8 [shape = 'u8[65536]{0}', space=vmem, size = 0x10000, scoped, tag = 'input window, operand 1']
    #allocation9 [shape = 's32[2]{0}', space=sflag, size = 0x8, scoped, tag = 'scoped memory for tpu_custom_call.1']
    #allocation10 [shape = 'u8[16384]{0}', space=vmem, size = 0x4000, scoped, tag = 'output window, operand 0']
    %8 = vsyncpa [#allocation6], 0
    %9 = vsyncpa [#allocation9], 0
    %s10 = scalar_lea.sflag [#allocation9], 1
    %11 = vsyncpa %s10, 0
    %12 = vsyncpa [#allocation7], 0
    %s13 = scalar_lea.sflag [#allocation7], 1
    %14 = vsyncpa %s13, 0
    loop: start=0, step=1, limit=8
    $region2: #{tpu_custom_call.1} parent=1 // loop_pre_header
      _
    $region3: #{tpu_custom_call.1} parent=1 // loop_header
      %s16 = sphi 0, %s20
      %p17 = scmp.ge.s32.totalorder %s16, 8
      %s23 = sphi 0, %s35
      %s24 = sphi 0, %s31
      %s25 = sphi 0, %s23
      %s26 = sphi 0, %s24
      %s27 = sphi 0, %s25
      %s28 = sphi 0, %s26
      %s38 = sphi 0, %s40
      %s41 = sphi 0, %s38
      %s42 = sphi 0, %s41
      %s58 = sphi 0, %s42
      %s68 = sphi 0, %s70
      %s71 = sphi 0, %s68
      %s72 = sphi 0, %s71
      %s88 = sphi 0, %s72
      %s98 = sphi 0, %s100
      %s101 = sphi 0, %s98
      %s102 = sphi 0, %s101
      %s118 = sphi 0, %s102
      %s132 = sphi 0, %s134
      %s135 = sphi 0, %s132
      %s136 = sphi 0, %s135
      %s152 = sphi 0, %s136
    $region4: #{tpu_custom_call.1} parent=1 // loop_header_branch
      %19 = sbr.rel (%p17) target = $region8
    $region5: #{tpu_custom_call.1} parent=1 // loop_body
      %s21 = ssub.s32 %s16, 1
      %s22 = ssub.s32 %s16, 2
      %s29 = sadd.s32 1, %s24
      %p30 = scmp.ge.s32.totalorder %s29, 6
      %s31 = scalar_select %p30, 0, %s29
      %s32 = sadd.s32 1, %s23
      %s33 = scalar_select %p30, %s32, %s23
      %p34 = scmp.ge.s32.totalorder %s33, 1
      %s35 = scalar_select %p34, 0, %s33
      %s36 = ssub.s32 %s23, %s35
      %p37 = scmp.eq.s32.totalorder %s36, 0
      %s39 = sadd.s32 %s38, 1
      %s40 = scalar_select %p37, %s38, %s39
      %p43 = pneg %p37
      %p44 = scmp.eq.s32.totalorder %s16, 5
      %p45 = por %p43, %p44
      %p46 = scmp.ne.s32.totalorder %s38, %s41
      %p47 = scmp.eq.s32.totalorder %s16, 0
      %p48 = por %p46, %p47
      %p49 = scmp.ne.s32.totalorder %s38, %s41
      %p50 = scmp.eq.s32.totalorder %s21, 5
      %p51 = por %p49, %p50
      %p52 = scmp.ne.s32.totalorder %s41, %s42
      %p53 = scmp.eq.s32.totalorder %s21, 0
      %p54 = por %p52, %p53
      %p55 = scmp.ne.s32.totalorder %s41, %s42
      %p56 = scmp.eq.s32.totalorder %s22, 5
      %p57 = por %p55, %p56
      %p59 = scmp.ne.s32.totalorder %s42, %s58
      %p60 = scmp.eq.s32.totalorder %s22, 0
      %p61 = por %p59, %p60
      %p62 = scmp.lt.s32.totalorder %s24, 2
      %s63 = scalar_select %p62, %s24, 2
      %p64 = scmp.lt.s32.totalorder %s31, 2
      %s65 = scalar_select %p64, %s31, 2
      %s66 = ssub.s32 %s63, %s65
      %p67 = scmp.eq.s32.totalorder %s66, 0
      %s69 = sadd.s32 %s68, 1
      %s70 = scalar_select %p67, %s68, %s69
      %p73 = pneg %p67
      %p74 = scmp.eq.s32.totalorder %s16, 5
      %p75 = por %p73, %p74
      %p76 = scmp.ne.s32.totalorder %s68, %s71
      %p77 = scmp.eq.s32.totalorder %s16, 0
      %p78 = por %p76, %p77
      %p79 = scmp.ne.s32.totalorder %s68, %s71
      %p80 = scmp.eq.s32.totalorder %s21, 5
      %p81 = por %p79, %p80
      %p82 = scmp.ne.s32.totalorder %s71, %s72
      %p83 = scmp.eq.s32.totalorder %s21, 0
      %p84 = por %p82, %p83
      %p85 = scmp.ne.s32.totalorder %s71, %s72
      %p86 = scmp.eq.s32.totalorder %s22, 5
      %p87 = por %p85, %p86
      %p89 = scmp.ne.s32.totalorder %s72, %s88
      %p90 = scmp.eq.s32.totalorder %s22, 0
      %p91 = por %p89, %p90
      %p92 = scmp.lt.s32.totalorder %s24, 2
      %s93 = scalar_select %p92, %s24, 2
      %p94 = scmp.lt.s32.totalorder %s31, 2
      %s95 = scalar_select %p94, %s31, 2
      %s96 = ssub.s32 %s93, %s95
      %p97 = scmp.eq.s32.totalorder %s96, 0
      %s99 = sadd.s32 %s98, 1
      %s100 = scalar_select %p97, %s98, %s99
      %p103 = pneg %p97
      %p104 = scmp.eq.s32.totalorder %s16, 5
      %p105 = por %p103, %p104
      %p106 = scmp.ne.s32.totalorder %s98, %s101
      %p107 = scmp.eq.s32.totalorder %s16, 0
      %p108 = por %p106, %p107
      %p109 = scmp.ne.s32.totalorder %s98, %s101
      %p110 = scmp.eq.s32.totalorder %s21, 5
      %p111 = por %p109, %p110
      %p112 = scmp.ne.s32.totalorder %s101, %s102
      %p113 = scmp.eq.s32.totalorder %s21, 0
      %p114 = por %p112, %p113
      %p115 = scmp.ne.s32.totalorder %s101, %s102
      %p116 = scmp.eq.s32.totalorder %s22, 5
      %p117 = por %p115, %p116
      %p119 = scmp.ne.s32.totalorder %s102, %s118
      %p120 = scmp.eq.s32.totalorder %s22, 0
      %p121 = por %p119, %p120
      %s122 = ssub.s32 %s24, 3
      %p123 = scmp.gt.s32.totalorder %s122, 0
      %s124 = scalar_select %p123, %s122, 0
      %s125 = ssub.s32 %s31, 3
      %p126 = scmp.gt.s32.totalorder %s125, 0
      %s127 = scalar_select %p126, %s125, 0
      %s128 = ssub.s32 %s23, %s35
      %s129 = ssub.s32 %s124, %s127
      %s130 = sor.u32 %s128, %s129
      %p131 = scmp.eq.s32.totalorder %s130, 0
      %s133 = sadd.s32 %s132, 1
      %s134 = scalar_select %p131, %s132, %s133
      %p137 = pneg %p131
      %p138 = scmp.eq.s32.totalorder %s16, 5
      %p139 = por %p137, %p138
      %p140 = scmp.ne.s32.totalorder %s132, %s135
      %p141 = scmp.eq.s32.totalorder %s16, 0
      %p142 = por %p140, %p141
      %p143 = scmp.ne.s32.totalorder %s132, %s135
      %p144 = scmp.eq.s32.totalorder %s21, 5
      %p145 = por %p143, %p144
      %p146 = scmp.ne.s32.totalorder %s135, %s136
      %p147 = scmp.eq.s32.totalorder %s21, 0
      %p148 = por %p146, %p147
      %p149 = scmp.ne.s32.totalorder %s135, %s136
      %p150 = scmp.eq.s32.totalorder %s22, 5
      %p151 = por %p149, %p150
      %p153 = scmp.ne.s32.totalorder %s136, %s152
      %p154 = scmp.eq.s32.totalorder %s22, 0
      %p155 = por %p153, %p154
      %p156 = scmp.le.s32.totalorder 1, %s16
      %p157 = scmp.lt.s32.totalorder %s16, 7
      %p158 = pnand %p156, %p157
      %p159 = pneg %p158
      // Predicated region
      $region9: #{tpu_custom_call.1} parent=5 // pred_check
        _
      $region10: #{tpu_custom_call.1} parent=5 // pred_check_branch
        %161 = sbr.rel (%p158) target = $region12
      $region11: #{tpu_custom_call.1} parent=5 // pred_region
        %s162 = ssub.s32 %s16, 1
        // Predicated region
        $region13: #{tpu_custom_call.1} parent=11 // pred_check
          %p163 = pneg %p54
        $region14: #{tpu_custom_call.1} parent=11 // pred_check_branch
          %165 = sbr.rel (%p163) target = $region16
        $region15: #{tpu_custom_call.1} parent=11 // pred_region
          %s166 = smul.u32 2, %s25
          %s168 = ssub.s32 128, 128
          %169 = vsyncadd [#allocation6], %s168
          %s170 = smul.addr %s166, 64
          %s171 = scalar_lea.hbm %s0, %s170
          %s172 = sshll.u32 [#allocation5], 4
          %s173 = int_to_ptr.vmem [resolvable:$true] %s172
          %178 = dma.hbm_to_vmem [thread:$0]  %s171, 128, %s173, [#allocation6], 64, 64, 4
        $region16: #{tpu_custom_call.1} parent=11 // pred_fallthru
          _
      $region12: #{tpu_custom_call.1} parent=5 // pred_fallthru
        _
      %p179 = scmp.lt.s32.totalorder %s16, 6
      // Predicated region
      $region17: #{tpu_custom_call.1} parent=5 // pred_check
        %p180 = pneg %p179
      $region18: #{tpu_custom_call.1} parent=5 // pred_check_branch
        %182 = sbr.rel (%p180) target = $region20
      $region19: #{tpu_custom_call.1} parent=5 // pred_region
        // Predicated region
        $region21: #{tpu_custom_call.1} parent=19 // pred_check
          %p183 = pneg %p78
        $region22: #{tpu_custom_call.1} parent=19 // pred_check_branch
          %185 = sbr.rel (%p183) target = $region24
        $region23: #{tpu_custom_call.1} parent=19 // pred_region
          %s186 = sand.u32 %s68, 1
          %s187 = scalar_lea.sflag [#allocation9], %s186
          %s188 = sand.u32 %s68, 1
          %s189 = smul.addr %s188, 64
          %s190 = scalar_lea.vmem [#allocation8], %s189
          %p191 = scmp.lt.s32.totalorder %s24, 2
          %s192 = scalar_select %p191, %s24, 2
          %s194 = ssub.s32 1024, 1024
          %195 = vsyncadd %s187, %s194
          %s196 = smul.addr %s192, 64
          %s197 = scalar_lea.hbm %s1, %s196
          %s198 = sshll.u32 %s190, 4
          %s199 = int_to_ptr.vmem [resolvable:$true] %s198
          %204 = dma.hbm_to_vmem [thread:$0]  %s197, 1024, %s199, %s187, 192, 64, 4
        $region24: #{tpu_custom_call.1} parent=19 // pred_fallthru
          _
        // Predicated region
        $region25: #{tpu_custom_call.1} parent=19 // pred_check
          %p205 = pneg %p108
        $region26: #{tpu_custom_call.1} parent=19 // pred_check_branch
          %207 = sbr.rel (%p205) target = $region28
        $region27: #{tpu_custom_call.1} parent=19 // pred_region
          %p208 = scmp.lt.s32.totalorder %s24, 2
          %s209 = scalar_select %p208, %s24, 2
          %p210 = scmp.lt.s32.totalorder %s209, 2
          %s211 = scalar_select %p210, %s209, 2
          %s212 = scalar_lea.vmem %s2, %s211
          %p213 = scmp.lt.s32.totalorder %s24, 2
          %s214 = scalar_select %p213, %s24, 2
        $region28: #{tpu_custom_call.1} parent=19 // pred_fallthru
          _
      $region20: #{tpu_custom_call.1} parent=5 // pred_fallthru
        _
      %p215 = scmp.le.s32.totalorder 1, %s16
      %p216 = scmp.lt.s32.totalorder %s16, 7
      %p217 = pnand %p215, %p216
      %p218 = pneg %p217
      // Predicated region
      $region29: #{tpu_custom_call.1} parent=5 // pred_check
        _
      $region30: #{tpu_custom_call.1} parent=5 // pred_check_branch
        %220 = sbr.rel (%p217) target = $region32
      $region31: #{tpu_custom_call.1} parent=5 // pred_region
        %s221 = ssub.s32 %s16, 1
        // Predicated region
        $region33: #{tpu_custom_call.1} parent=31 // pred_check
          %p222 = pneg %p54
        $region34: #{tpu_custom_call.1} parent=31 // pred_check_branch
          %224 = sbr.rel (%p222) target = $region36
        $region35: #{tpu_custom_call.1} parent=31 // pred_region
          %225 = dma.done [#allocation6], 128
        $region36: #{tpu_custom_call.1} parent=31 // pred_fallthru
          _
        %s226 = sand.u32 %s71, 1
        %s227 = scalar_lea.sflag [#allocation9], %s226
        %s228 = sand.u32 %s71, 1
        %s229 = smul.addr %s228, 64
        %s230 = scalar_lea.vmem [#allocation8], %s229
        // Predicated region
        $region37: #{tpu_custom_call.1} parent=31 // pred_check
          %p231 = pneg %p84
        $region38: #{tpu_custom_call.1} parent=31 // pred_check_branch
          %233 = sbr.rel (%p231) target = $region40
        $region39: #{tpu_custom_call.1} parent=31 // pred_region
          %234 = dma.done %s227, 1024
        $region40: #{tpu_custom_call.1} parent=31 // pred_fallthru
          _
        %p235 = pneg %p54
        %p236 = pneg %p51
        %s237 = sand.u32 %s71, 1
        %s238 = scalar_lea.sflag [#allocation9], %s237
        %s239 = sand.u32 %s71, 1
        %s240 = smul.addr %s239, 64
        %s241 = scalar_lea.vmem [#allocation8], %s240
        %p242 = pneg %p84
        %p243 = pneg %p81
        %p244 = scmp.lt.s32.totalorder %s26, 2
        %s245 = scalar_select %p244, %s26, 2
        %p246 = scmp.lt.s32.totalorder %s245, 2
        %s247 = scalar_select %p246, %s245, 2
        %s248 = scalar_lea.vmem %s2, %s247
        %p249 = pneg %p114
        %p250 = pneg %p111
        %p251 = pneg %p148
        %p252 = pneg %p145
        %s253 = sand.u32 %s135, 1
        %s254 = scalar_lea.sflag [#allocation7], %s253
        %s255 = sand.u32 %s135, 1
        %s256 = smul.addr %s255, 16
        %s257 = scalar_lea.vmem [#allocation10], %s256
        %s258 = smul.u32 2, %s25
        %p259 = scmp.lt.s32.totalorder %s26, 2
        %s260 = scalar_select %p259, %s26, 2
        %p261 = scmp.lt.s32.totalorder %s26, 2
        %s262 = scalar_select %p261, %s26, 2
        %p263 = scmp.lt.s32.totalorder %s262, 2
        %s264 = scalar_select %p263, %s262, 2
        %s265 = scalar_lea.vmem %s2, %s264
        %p266 = scmp.lt.s32.totalorder %s26, 2
        %s267 = scalar_select %p266, %s26, 2
        %s268 = ssub.s32 %s26, 3
        %p269 = scmp.gt.s32.totalorder %s268, 0
        %s270 = scalar_select %p269, %s268, 0
        %s271 = smul.u32 2, %s25
        %p273 = scmp.eq.s32.totalorder %s26, 0
        // Predicated region
        $region41: #{tpu_custom_call.1} parent=31 // pred_check
          %p274 = pneg %p273
        $region42: #{tpu_custom_call.1} parent=31 // pred_check_branch
          %276 = sbr.rel (%p274) target = $region44
        $region43: #{tpu_custom_call.1} parent=31 // pred_region
          %vm277 = vcmask 7168
          %278 = vst.msk [vmem:[#allocation3] sm:$0xff] %vm277, -inf
          %279 = vst.msk [vmem:[#allocation3 + $0x8] sm:$0xff] %vm277, -inf
          %280 = vst.msk [vmem:[#allocation4] sm:$0xff] %vm277, 0.0
          %281 = vst.msk [vmem:[#allocation4 + $0x8] sm:$0xff] %vm277, 0.0
        $region44: #{tpu_custom_call.1} parent=31 // pred_fallthru
          _
        %p282 = scmp.lt.s32.totalorder %s26, 3
        // Predicated region
        $region45: #{tpu_custom_call.1} parent=31 // pred_check
          %p283 = pneg %p282
        $region46: #{tpu_custom_call.1} parent=31 // pred_check_branch
          %285 = sbr.rel (%p283) target = $region48
        $region47: #{tpu_custom_call.1} parent=31 // pred_region
          %v286 = vld [vmem:[#allocation5] sm:$0xf]
          %v287 = vld [vmem:[#allocation5 + $0x4] sm:$0xf]
          %v288 = vld [vmem:[%s230] sm:$0xf]
          %v289 = vld [vmem:[%s230 + $0x4] sm:$0xf]
          %v290 = vld [vmem:[%s230 + $0x8] sm:$0xf]
          %v291 = vld [vmem:[%s230 + $0xc] sm:$0xf]
          %v292 = vld [vmem:[%s230 + $0x10] sm:$0xf]
          %v293 = vld [vmem:[%s230 + $0x14] sm:$0xf]
          %v294 = vld [vmem:[%s230 + $0x18] sm:$0xf]
          %v295 = vld [vmem:[%s230 + $0x1c] sm:$0xf]
          %v296 = vld [vmem:[%s230 + $0x20] sm:$0xf]
          %v297 = vld [vmem:[%s230 + $0x24] sm:$0xf]
          %v298 = vld [vmem:[%s230 + $0x28] sm:$0xf]
          %v299 = vld [vmem:[%s230 + $0x2c] sm:$0xf]
          %v300 = vld [vmem:[%s230 + $0x30] sm:$0xf]
          %v301 = vld [vmem:[%s230 + $0x34] sm:$0xf]
          %v302 = vld [vmem:[%s230 + $0x38] sm:$0xf]
          %v303 = vld [vmem:[%s230 + $0x3c] sm:$0xf]
          %v304 = vld [vmem:[%s265] sm:$0x1]
          %v306 = vlaneseq
          %v307 = vshrl.u32 %v306, 7
          %v308 = vsub.s32 0, %v307
          %v309 = vrot.slane %v304, %v308
          %v313 = vunpack.c.l.b16 %v286
          %v314 = vunpack.c.l.b16 %v287
          %v315 = vpack.c.b16 %v314, %v313
          %v333 = vunpack.c.l.b16 %v288
          %v334 = vunpack.c.l.b16 %v289
          %v335 = vunpack.c.l.b16 %v290
          %v336 = vunpack.c.l.b16 %v291
          %v337 = vunpack.c.l.b16 %v292
          %v338 = vunpack.c.l.b16 %v293
          %v339 = vunpack.c.l.b16 %v294
          %v340 = vunpack.c.l.b16 %v295
          %v341 = vunpack.c.l.b16 %v296
          %v342 = vunpack.c.l.b16 %v297
          %v343 = vunpack.c.l.b16 %v298
          %v344 = vunpack.c.l.b16 %v299
          %v345 = vunpack.c.l.b16 %v300
          %v346 = vunpack.c.l.b16 %v301
          %v347 = vunpack.c.l.b16 %v302
          %v348 = vunpack.c.l.b16 %v303
          %v349 = vpack.c.b16 %v334, %v333
          %v350 = vpack.c.b16 %v336, %v335
          %v351 = vpack.c.b16 %v338, %v337
          %v352 = vpack.c.b16 %v340, %v339
          %v353 = vpack.c.b16 %v342, %v341
          %v354 = vpack.c.b16 %v344, %v343
          %v355 = vpack.c.b16 %v346, %v345
          %v356 = vpack.c.b16 %v348, %v347
          %365 = vmatprep.subr.bf16.mxu0 0
          %366 = vmatpush1.bf16.msra.mxu0 %v349
          %367 = vmatprep.subr.bf16.mxu0 0
          %368 = vmatpush1.bf16.msra.mxu0 %v350
          %369 = vmatprep.subr.bf16.mxu0 0
          %370 = vmatpush1.bf16.msra.mxu0 %v351
          %371 = vmatprep.subr.bf16.mxu0 0
          %372 = vmatpush1.bf16.msra.mxu0 %v352
          %373 = vmatprep.subr.bf16.mxu0 0
          %374 = vmatpush1.bf16.msra.mxu0 %v353
          %375 = vmatprep.subr.bf16.mxu0 0
          %376 = vmatpush1.bf16.msra.mxu0 %v354
          %377 = vmatprep.subr.bf16.mxu0 0
          %378 = vmatpush1.bf16.msra.mxu0 %v355
          %379 = vmatprep.subr.bf16.mxu0 0
          %380 = vmatpush1.bf16.msra.mxu0 %v356
          %381 = vmatprep.subr.bf16.mxu0 0
          %382 = vmatpush1.bf16.msra.mxu0 0
          %383 = vmatprep.subr.bf16.mxu0 0
          %384 = vmatpush1.bf16.msra.mxu0 0
          %385 = vmatprep.subr.bf16.mxu0 0
          %386 = vmatpush1.bf16.msra.mxu0 0
          %387 = vmatprep.subr.bf16.mxu0 0
          %388 = vmatpush1.bf16.msra.mxu0 0
          %389 = vmatprep.subr.bf16.mxu0 0
          %390 = vmatpush1.bf16.msra.mxu0 0
          %391 = vmatprep.subr.bf16.mxu0 0
          %392 = vmatpush1.bf16.msra.mxu0 0
          %393 = vmatprep.subr.bf16.mxu0 0
          %394 = vmatpush1.bf16.msra.mxu0 0
          %395 = vmatprep.subr.bf16.mxu0 0
          %396 = vmatpush1.bf16.msra.mxu0 0
          %397 = vmatprep.mubr.bf16.mxu0 0
          %398 = vmatmul.mubr.bf16.gmra.mrb[0].mxu0 %v315
          %v399 = vpop.f32.mrb[0].mxu0
          %v400 = vadd.f32 %v309, %v399
          %v401 = vpop.f32.mrb[0].mxu0
          %v402 = vpop.f32.mrb[0].mxu0
          %v403 = vadd.f32 %v309, %v402
          %v404 = vpop.f32.mrb[0].mxu0
          %405 = vdwg.mxu0
          %s406 = smul.u32 %s26, 16
          %s407 = scalar_lea.vmem [#allocation2], %s406
          %408 = vst [vmem:[%s407] sm:$0xff] %v400
          %409 = vst [vmem:[%s407 + $0x8] sm:$0xff] %v403
          %v410 = vld [vmem:[#allocation3] sm:$0xff]
          %v411 = vld [vmem:[#allocation3 + $0x8] sm:$0xff]
          %412 = vmax.xlane.f32.xlu0 %v400
          %v413 = vpop.xlane.xlu0 %412
          %414 = vmax.xlane.f32.xlu0 %v403
          %v415 = vpop.xlane.xlu0 %414
          %v416 = vmax.f32 %v410, %v413
          %v417 = vmax.f32 %v411, %v415
          %v418 = vld [vmem:[#allocation4] sm:$0xff]
          %v419 = vld [vmem:[#allocation4 + $0x8] sm:$0xff]
          %v420 = vsub.f32 %v410, %v416
          %v421 = vsub.f32 %v411, %v417
          %v422 = vmul.f32 %v420, 1.442695
          %v423 = vpow.pop %v422
          %v424 = vmul.f32 %v421, 1.442695
          %v425 = vpow.pop %v424
          %v426 = vmul.f32 %v418, %v423
          %v427 = vmul.f32 %v419, %v425
          %429 = vset.pattern.permute.xlu0 0
          %430 = vperm.xlu0 %429, %v416
          %v431 = vpop.permute.xlu0 %430
          %434 = vset.pattern.permute.xlu0 0
          %435 = vperm.xlu0 %434, %v417
          %v436 = vpop.permute.xlu0 %435
          %v438 = vsub.f32 %v400, %v431
          %v439 = vsub.f32 %v403, %v436
          %v440 = vmul.f32 %v438, 1.442695
          %v441 = vpow.pop %v440
          %v442 = vmul.f32 %v439, 1.442695
          %v443 = vpow.pop %v442
          %444 = vadd.xlane.f32.xlu0 %v441
          %v445 = vpop.xlane.xlu0 %444
          %446 = vadd.xlane.f32.xlu0 %v443
          %v447 = vpop.xlane.xlu0 %446
          %v448 = vadd.f32 %v426, %v445
          %v449 = vadd.f32 %v427, %v447
          %vm450 = vcmask 7168
          %451 = vst.msk [vmem:[#allocation4] sm:$0xff] %vm450, %v448
          %452 = vst.msk [vmem:[#allocation4 + $0x8] sm:$0xff] %vm450, %v449
          %453 = vst.msk [vmem:[#allocation3] sm:$0xff] %vm450, %v416
          %454 = vst.msk [vmem:[#allocation3 + $0x8] sm:$0xff] %vm450, %v417
        $region48: #{tpu_custom_call.1} parent=31 // pred_fallthru
          _
        %p455 = scmp.ge.s32.totalorder %s26, 3
        // Predicated region
        $region49: #{tpu_custom_call.1} parent=31 // pred_check
          %p456 = pneg %p455
        $region50: #{tpu_custom_call.1} parent=31 // pred_check_branch
          %458 = sbr.rel (%p456) target = $region52
        $region51: #{tpu_custom_call.1} parent=31 // pred_region
          %s459 = ssub.s32 %s26, 3
          %v460 = vld [vmem:[#allocation3] sm:$0xff]
          %v461 = vld [vmem:[#allocation3 + $0x8] sm:$0xff]
          %v462 = vld [vmem:[#allocation4] sm:$0xff]
          %v463 = vld [vmem:[#allocation4 + $0x8] sm:$0xff]
          %v464 = vlog2.pop %v462
          %v465 = vmul.f32 %v464, 0.6931472
          %v466 = vlog2.pop %v463
          %v467 = vmul.f32 %v466, 0.6931472
          %v468 = vadd.f32 %v460, %v465
          %v469 = vadd.f32 %v461, %v467
          %s470 = smul.u32 %s459, 16
          %s471 = scalar_lea.vmem [#allocation2], %s470
          %v472 = vld [vmem:[%s471] sm:$0xff]
          %v473 = vld [vmem:[%s471 + $0x8] sm:$0xff]
          %475 = vset.pattern.permute.xlu0 0
          %476 = vperm.xlu0 %475, %v468
          %v477 = vpop.permute.xlu0 %476
          %480 = vset.pattern.permute.xlu0 0
          %481 = vperm.xlu0 %480, %v469
          %v482 = vpop.permute.xlu0 %481
          %v484 = vsub.f32 %v472, %v477
          %v485 = vsub.f32 %v473, %v482
          %486 = vst [vmem:[%s257] sm:$0xff] %v484
          %487 = vst [vmem:[%s257 + $0x8] sm:$0xff] %v485
        $region52: #{tpu_custom_call.1} parent=31 // pred_fallthru
          _
        %s488 = sand.u32 %s135, 1
        %s489 = scalar_lea.sflag [#allocation7], %s488
        %s490 = sand.u32 %s135, 1
        %s491 = smul.addr %s490, 16
        %s492 = scalar_lea.vmem [#allocation10], %s491
        // Predicated region
        $region53: #{tpu_custom_call.1} parent=31 // pred_check
          %p493 = pneg %p145
        $region54: #{tpu_custom_call.1} parent=31 // pred_check_branch
          %495 = sbr.rel (%p493) target = $region56
        $region55: #{tpu_custom_call.1} parent=31 // pred_region
          %s496 = ssub.s32 %s26, 3
          %p497 = scmp.gt.s32.totalorder %s496, 0
          %s498 = scalar_select %p497, %s496, 0
          %s499 = smul.u32 2, %s25
          %s501 = ssub.s32 256, 256
          %502 = vsyncadd %s489, %s501
          %s503 = smul.addr %s499, 3
          %s504 = sadd.s32 %s498, %s503
          %s505 = smul.addr %s504, 128
          %s506 = scalar_lea.hbm %s3, %s505
          %s507 = sshll.u32 %s492, 4
          %s508 = int_to_ptr.vmem [resolvable:$true] %s507
          %513 = dma.vmem_to_hbm [thread:$0]  %s508, 256, %s506, %s489, 128, 384, 8
        $region56: #{tpu_custom_call.1} parent=31 // pred_fallthru
          _
      $region32: #{tpu_custom_call.1} parent=5 // pred_fallthru
        _
      %p514 = scmp.le.s32.totalorder 2, %s16
      // Predicated region
      $region57: #{tpu_custom_call.1} parent=5 // pred_check
        %p515 = pneg %p514
      $region58: #{tpu_custom_call.1} parent=5 // pred_check_branch
        %517 = sbr.rel (%p515) target = $region60
      $region59: #{tpu_custom_call.1} parent=5 // pred_region
        %s518 = ssub.s32 %s16, 2
        // Predicated region
        $region61: #{tpu_custom_call.1} parent=59 // pred_check
          %p519 = pneg %p151
        $region62: #{tpu_custom_call.1} parent=59 // pred_check_branch
          %521 = sbr.rel (%p519) target = $region64
        $region63: #{tpu_custom_call.1} parent=59 // pred_region
          %s522 = sand.u32 %s136, 1
          %s523 = scalar_lea.sflag [#allocation7], %s522
          %s524 = sand.u32 %s136, 1
          %s525 = smul.addr %s524, 16
          %s526 = scalar_lea.vmem [#allocation10], %s525
          %527 = dma.done %s523, 256
        $region64: #{tpu_custom_call.1} parent=59 // pred_fallthru
          _
      $region60: #{tpu_custom_call.1} parent=5 // pred_fallthru
        _
    $region6: #{tpu_custom_call.1} parent=1 // loop_footer
      %s20 = sadd.s32 1, %s16
    $region7: #{tpu_custom_call.1} parent=1 // loop_footer_branch
      %15 = sbr.rel target = $region3
    $region8: #{tpu_custom_call.1} parent=1 // loop_exit
      _
    %528 = vsyncpa [#allocation6], 1
    %s529 = scalar_lea.sflag [#allocation6], 1
    %530 = vsyncpa %s529, 1
    %531 = vsyncpa [#allocation9], 1
    %s532 = scalar_lea.sflag [#allocation9], 1
    %533 = vsyncpa %s532, 1
    %534 = vsyncpa [#allocation7], 1
    %s535 = scalar_lea.sflag [#allocation7], 1
    %536 = vsyncpa %s535, 1

</llo_original>
